<compile_context>
chip_gen: v6e
topology: v6e:2x2x1
jax: 0.10.0
libtpu: 0.0.40
codegen_flags: <defaults>
</compile_context>

<pallas_src>
import functools

import jax
import jax.numpy as jnp
import numpy as np
from jax.experimental import pallas as pl
from jax.experimental.pallas import tpu as pltpu


_LANE = 128
_SUBLANE = 8

# VMEM budgets (bytes).  v7x has only 64 MiB per TensorCore, so the fused
# (A_hat-resident) path is sized against a 40 MiB footprint estimate and
# compiled with a 48 MiB scoped limit (safe on v5e/v6e/v7x).  The tiled path's
# per-step working set at 512x512 tiles is ~1.5 MiB, so 32 MiB is generous.
_VMEM_LIMIT_FUSED = 48 * 1024 * 1024
_VMEM_LIMIT_TILED = 32 * 1024 * 1024
_FUSED_VMEM_BUDGET = 40 * 1024 * 1024


# ----------------------------------------------------------------------------
# small helpers
# ----------------------------------------------------------------------------
def _round_up(x, m):
    return ((x + m - 1) // m) * m


def _pad2(arr, rows, cols):
    r, c = arr.shape
    return jnp.pad(arr, ((0, rows - r), (0, cols - c)))


def _full_spec(shape):
    # Whole-array block (used only on the small fused path).
    return pl.BlockSpec(shape, lambda *_: (0,) * len(shape))


def _pool_tile_size(n_pad, cap=4096):
    """Largest tile (multiple of 128) that divides n_pad, capped at `cap`.
    Single grid step whenever the whole node dim fits."""
    if n_pad <= cap:
        return n_pad
    best = _LANE
    t = _LANE
    while t <= cap:
        if n_pad % t == 0:
            best = t
        t += _LANE
    return best


def _masked_layernorm(h, gamma, beta, true_c, eps):
    """LayerNorm over the last dim restricted to the first `true_c` lanes.

    gamma/beta are zero in the padded lanes, so padded lanes come out as 0."""
    f_pad = h.shape[-1]
    if true_c == f_pad:
        mean = jnp.mean(h, axis=-1, keepdims=True)
        diff = h - mean
        var = jnp.mean(diff * diff, axis=-1, keepdims=True)
    else:
        lane = jax.lax.broadcasted_iota(jnp.int32, h.shape, dimension=h.ndim - 1)
        mask = (lane < true_c).astype(jnp.float32)
        inv_c = 1.0 / float(true_c)
        mean = jnp.sum(h * mask, axis=-1, keepdims=True) * inv_c
        diff = (h - mean) * mask
        var = jnp.sum(diff * diff, axis=-1, keepdims=True) * inv_c
    out = (h - mean) * jax.lax.rsqrt(var + eps)
    return out * gamma + beta


# ----------------------------------------------------------------------------
# Pallas kernels
# ----------------------------------------------------------------------------
def _fused_encoder_kernel(*refs, num_layers, true_dims, acts, eps=1e-5):
    """Whole encoder (all layers + pooling) in one kernel; h stays in VMEM."""
    a_ref, x_ref, p_ref = refs[0], refs[1], refs[2]
    layer_refs = refs[3:3 + 4 * num_layers]
    h_out_ref = refs[3 + 4 * num_layers]
    z_out_ref = refs[4 + 4 * num_layers]

    a = a_ref[...]          # [Np, Np]      bf16
    h = x_ref[...]          # [Np, Fin_pad] bf16
    for l in range(num_layers):
        w_r, b_r, g_r, be_r = layer_refs[4 * l:4 * l + 4]
        # GCNConv: A_hat @ (X @ W) + b   (bias added after propagation, as in PyG)
        xw = jnp.dot(h, w_r[...], preferred_element_type=jnp.float32)
        hf = jnp.dot(a, xw.astype(jnp.bfloat16), preferred_element_type=jnp.float32)
        hf = hf + b_r[...]
        if acts[l]:
            hf = jnp.maximum(hf, 0.0)
            hf = _masked_layernorm(hf, g_r[...], be_r[...], true_dims[l], eps)
            h = hf.astype(jnp.bfloat16)
        else:
            h = hf
    h_out_ref[...] = h.astype(h_out_ref.dtype)
    # global_mean_pool fused in: z = P @ h
    z_out_ref[...] = jnp.dot(p_ref[...], h.astype(jnp.bfloat16),
                             preferred_element_type=jnp.float32).astype(z_out_ref.dtype)


def _gcn_layer_tiled_kernel(a_ref, x_ref, w_ref, b_ref, g_ref, be_ref, o_ref,
                            acc_ref, *, apply_act, true_c, eps=1e-5):
    """One GCN layer, tiled over (row tile i, node-contraction tile k).

    Accumulates (A_hat @ X) tile-by-tile into an f32 VMEM scratch, then at the
    last k step applies the (tiny, feature-resident) weight matmul, bias, ReLU
    and masked LayerNorm.  Association is (A_hat @ X) @ W == A_hat @ (X @ W).
    X may be lane-unpadded (e.g. 8 true channels on layer 1): the scratch and
    W are sized to the true X width, so no zero lanes are streamed or MXU'd.
    """
    k = pl.program_id(1)

    @pl.when(k == 0)
    def _():
        acc_ref[...] = jnp.zeros_like(acc_ref)

    acc_ref[...] += jnp.dot(a_ref[...], x_ref[...],
                            preferred_element_type=jnp.float32)

    @pl.when(k == pl.num_programs(1) - 1)
    def _():
        h = jnp.dot(acc_ref[...].astype(jnp.bfloat16), w_ref[...],
                    preferred_element_type=jnp.float32)
        h = h + b_ref[...]
        if apply_act:
            h = jnp.maximum(h, 0.0)
            h = _masked_layernorm(h, g_ref[...], be_ref[...], true_c, eps)
        o_ref[...] = h.astype(o_ref.dtype)


def _pool_tiled_kernel(p_ref, h_ref, o_ref, acc_ref):
    """global_mean_pool: z += P[:, k_tile] @ h[k_tile, :] (usually 1 step)."""
    k = pl.program_id(0)

    @pl.when(k == 0)
    def _():
        acc_ref[...] = jnp.zeros_like(acc_ref)

    acc_ref[...] += jnp.dot(p_ref[...], h_ref[...].astype(jnp.bfloat16),
                            preferred_element_type=jnp.float32)

    @pl.when(k == pl.num_programs(0) - 1)
    def _():
        o_ref[...] = acc_ref[...].astype(o_ref.dtype)


# ----------------------------------------------------------------------------
# Pallas wrappers
# ----------------------------------------------------------------------------
def gcn_layer_tiled(a_pad, x_pad, w_pad, b_pad, gm_pad, be_pad, *, apply_act,
                    true_c, tile_m, tile_k, out_dtype):
    n_row_pad, n_col_pad = a_pad.shape
    f_x = x_pad.shape[1]            # true (possibly unpadded) X width
    f_out = w_pad.shape[1]          # lane-padded output width
    grid = (n_row_pad // tile_m, n_col_pad // tile_k)
    kernel = functools.partial(_gcn_layer_tiled_kernel,
                               apply_act=apply_act, true_c=true_c)
    return pl.pallas_call(
        kernel,
        out_shape=jax.ShapeDtypeStruct((n_row_pad, f_out), out_dtype),
        grid=grid,
        in_specs=[
            pl.BlockSpec((tile_m, tile_k), lambda i, k: (i, k)),   # A_hat tile (dominant stream)
            pl.BlockSpec((tile_k, f_x), lambda i, k: (k, 0)),      # X tile (lane-unpadded on layer 1)
            pl.BlockSpec((f_x, f_out), lambda i, k: (0, 0)),       # W     (resident)
            pl.BlockSpec((1, f_out), lambda i, k: (0, 0)),         # bias  (resident)
            pl.BlockSpec((1, f_out), lambda i, k: (0, 0)),         # gamma (resident)
            pl.BlockSpec((1, f_out), lambda i, k: (0, 0)),         # beta  (resident)
        ],
        out_specs=pl.BlockSpec((tile_m, f_out), lambda i, k: (i, 0)),
        scratch_shapes=[pltpu.VMEM((tile_m, f_x), jnp.float32)],
        compiler_params=pltpu.CompilerParams(
            dimension_semantics=("parallel", "arbitrary"),
            vmem_limit_bytes=_VMEM_LIMIT_TILED),
    )(a_pad, x_pad, w_pad, b_pad, gm_pad, be_pad)


def mean_pool_tiled(p_pad, h_pad, *, tile_k):
    g_rows, n_pad = p_pad.shape
    f_pad = h_pad.shape[1]
    return pl.pallas_call(
        _pool_tiled_kernel,
        out_shape=jax.ShapeDtypeStruct((g_rows, f_pad), jnp.float32),
        grid=(n_pad // tile_k,),
        in_specs=[
            pl.BlockSpec((g_rows, tile_k), lambda k: (0, k)),
            pl.BlockSpec((tile_k, f_pad), lambda k: (k, 0)),
        ],
        out_specs=pl.BlockSpec((g_rows, f_pad), lambda k: (0, 0)),
        scratch_shapes=[pltpu.VMEM((g_rows, f_pad), jnp.float32)],
        compiler_params=pltpu.CompilerParams(
            dimension_semantics=("arbitrary",),
            vmem_limit_bytes=_VMEM_LIMIT_TILED),
    )(p_pad, h_pad)


# ----------------------------------------------------------------------------
# Plain-JAX glue: normalized adjacency, pooling matrix, parameters
# ----------------------------------------------------------------------------
def build_norm_adj(edge_index, num_nodes):
    """Dense GCN-normalized adjacency matching PyG gcn_norm (add_self_loops=True)."""
    src, dst = edge_index[0], edge_index[1]
    a_in = jnp.zeros((num_nodes, num_nodes), jnp.float32).at[dst, src].add(1.0)
    a_in = a_in + jnp.eye(num_nodes, dtype=jnp.float32)
    deg = jnp.sum(a_in, axis=1)
    dinv = jax.lax.rsqrt(deg)
    return a_in * dinv[:, None] * dinv[None, :]


def build_pool_matrix(batch, num_graphs, num_nodes):
    """P[g, n] = 1/count(g) if batch[n] == g else 0  (global_mean_pool)."""
    one_hot = (batch[None, :] == jnp.arange(num_graphs)[:, None]).astype(jnp.float32)
    counts = jnp.maximum(jnp.sum(one_hot, axis=1, keepdims=True), 1.0)
    return one_hot / counts


def init_params(key, in_channels_node, out_channels, num_layers):
    """Glorot-uniform weights, zero bias, unit/zero LayerNorm affine."""
    params = []
    in_c = in_channels_node
    for i in range(num_layers):
        out_c = out_channels if i == num_layers - 1 else 2 * out_channels
        key, kw = jax.random.split(key)
        limit = (6.0 / (in_c + out_c)) ** 0.5
        w = jax.random.uniform(kw, (in_c, out_c), jnp.float32, -limit, limit)
        b = jnp.zeros((out_c,), jnp.float32)
        gamma = jnp.ones((out_c,), jnp.float32)
        beta = jnp.zeros((out_c,), jnp.float32)
        apply_act = (i != num_layers - 1)   # ReLU + LayerNorm after non-final GCNConv
        params.append((w, b, gamma, beta, apply_act))
        in_c = out_c
    return params


def _pad_layer_params(w, b, gamma, beta, f_in_target):
    """Pad W rows to f_in_target and all feature dims to a lane multiple."""
    f_out = w.shape[1]
    f_out_pad = _round_up(f_out, _LANE)
    w_p = _pad2(w, f_in_target, f_out_pad).astype(jnp.bfloat16)
    b_p = _pad2(b.reshape(1, -1), 1, f_out_pad)
    g_p = _pad2(gamma.reshape(1, -1), 1, f_out_pad)     # padded lanes -> 0
    be_p = _pad2(beta.reshape(1, -1), 1, f_out_pad)     # padded lanes -> 0
    return w_p, b_p, g_p, be_p, f_out, f_out_pad


def _fused_vmem_bytes(n, f_in, params, num_graphs):
    """Estimated VMEM footprint of the fully-fused path.

    Assumes whole-array blocks may be double-buffered by the pipeline even at
    grid=(1,), plus ~6 f32 [N, F_max] temporaries inside the kernel."""
    n_pad = _round_up(max(n, _SUBLANE), _SUBLANE)
    g_rows = _round_up(max(num_graphs, _SUBLANE), _SUBLANE)
    f_prev_pad = _round_up(f_in, _LANE)
    f_max = f_prev_pad
    w_bytes = 0
    for (w, _, _, _, _) in params:
        f_out_pad = _round_up(w.shape[1], _LANE)
        w_bytes += f_prev_pad * f_out_pad * 2 + 3 * f_out_pad * 4
        f_max = max(f_max, f_out_pad)
        f_prev_pad = f_out_pad
    f_last = f_prev_pad
    io = (n_pad * n_pad * 2                      # A_hat (bf16)
          + n_pad * _round_up(f_in, _LANE) * 2   # X
          + g_rows * n_pad * 2                   # pooling matrix
          + w_bytes
          + n_pad * f_last * 4                   # h output (f32)
          + g_rows * f_last * 4)                 # pooled output (f32)
    return 2 * io + 6 * n_pad * f_max * 4


# ----------------------------------------------------------------------------
# Forward passes
# ----------------------------------------------------------------------------
def _forward_fused(x, a_hat, pool, params):
    n, f_in = x.shape
    g = pool.shape[0]
    n_pad = _round_up(max(n, _SUBLANE), _SUBLANE)
    g_rows = _round_up(max(g, _SUBLANE), _SUBLANE)
    f_in_pad = _round_up(f_in, _LANE)

    a_pad = _pad2(a_hat, n_pad, n_pad).astype(jnp.bfloat16)
    x_pad = _pad2(x, n_pad, f_in_pad).astype(jnp.bfloat16)
    p_pad = _pad2(pool, g_rows, n_pad).astype(jnp.bfloat16)

    layer_inputs, true_dims, acts = [], [], []
    f_prev_pad = f_in_pad
    for (w, b, gamma, beta, apply_act) in params:
        w_p, b_p, g_p, be_p, f_out, f_out_pad = _pad_layer_params(
            w, b, gamma, beta, f_prev_pad)
        layer_inputs += [w_p, b_p, g_p, be_p]
        true_dims.append(f_out)
        acts.append(apply_act)
        f_prev_pad = f_out_pad

    num_layers = len(params)
    f_last_pad = f_prev_pad
    all_inputs = [a_pad, x_pad, p_pad] + layer_inputs
    kernel = functools.partial(_fused_encoder_kernel, num_layers=num_layers,
                               true_dims=tuple(true_dims), acts=tuple(acts))
    h_pad, z_pad = pl.pallas_call(
        kernel,
        out_shape=(jax.ShapeDtypeStruct((n_pad, f_last_pad), jnp.float32),
                   jax.ShapeDtypeStruct((g_rows, f_last_pad), jnp.float32)),
        grid=(1,),
        in_specs=[_full_spec(arr.shape) for arr in all_inputs],
        out_specs=(_full_spec((n_pad, f_last_pad)),
                   _full_spec((g_rows, f_last_pad))),
        compiler_params=pltpu.CompilerParams(
            dimension_semantics=("arbitrary",),
            vmem_limit_bytes=_VMEM_LIMIT_FUSED),
    )(*all_inputs)

    out_c = params[-1][0].shape[1]
    return h_pad[:n, :out_c], z_pad[:g, :out_c]


def _forward_tiled(x, a_hat, pool, params, *, tile_m, tile_k):
    assert tile_m % _LANE == 0 and tile_k % _LANE == 0, \
        "tile_m / tile_k must be multiples of 128"
    n, f_in = x.shape
    g = pool.shape[0]
    # Independent row / col padding (no lcm blow-up for asymmetric tiles).
    n_row_pad = _round_up(n, tile_m)
    n_col_pad = _round_up(n, tile_k)
    g_rows = _round_up(max(g, _SUBLANE), _SUBLANE)

    a_pad = _pad2(a_hat, n_row_pad, n_col_pad).astype(jnp.bfloat16)
    # Layer-1 X keeps its TRUE channel count on lanes (no 128-pad) -> 16x less
    # HBM traffic for an 8-channel input; later layers are already lane-dense.
    h = _pad2(x, n_col_pad, f_in).astype(jnp.bfloat16)

    num_layers = len(params)
    for l, (w, b, gamma, beta, apply_act) in enumerate(params):
        f_x = h.shape[1]
        w_p, b_p, g_p, be_p, f_out, _ = _pad_layer_params(w, b, gamma, beta, f_x)
        is_last = (l == num_layers - 1)
        h_out = gcn_layer_tiled(a_pad, h, w_p, b_p, g_p, be_p,
                                apply_act=apply_act, true_c=f_out,
                                tile_m=tile_m, tile_k=tile_k,
                                out_dtype=jnp.float32 if is_last else jnp.bfloat16)
        if is_last:
            h = h_out
        elif n_row_pad < n_col_pad:
            h = jnp.pad(h_out, ((0, n_col_pad - n_row_pad), (0, 0)))
        elif n_row_pad > n_col_pad:
            h = h_out[:n_col_pad]
        else:
            h = h_out

    p_pad = _pad2(pool, g_rows, n_row_pad).astype(jnp.bfloat16)
    z_pad = mean_pool_tiled(p_pad, h, tile_k=_pool_tile_size(n_row_pad))

    out_c = params[-1][0].shape[1]
    return h[:n, :out_c], z_pad[:g, :out_c]


def gcn_encoder_forward(x, edge_index, batch, params, num_graphs, *,
                        mode="auto", tile_m=512, tile_k=512):
    n = x.shape[0]
    if mode == "auto":
        # Keep A_hat resident (fused) whenever the estimated footprint fits the
        # per-generation-safe VMEM budget (~40 MiB -> roughly N <~ 2500).
        est = _fused_vmem_bytes(n, x.shape[1], params, num_graphs)
        mode = "fused" if est <= _FUSED_VMEM_BUDGET else "tiled"
    a_hat = build_norm_adj(edge_index, n)
    pool = build_pool_matrix(batch, num_graphs, n)
    if mode == "fused":
        return _forward_fused(x, a_hat, pool, params)
    return _forward_tiled(x, a_hat, pool, params, tile_m=tile_m, tile_k=tile_k)


# ----------------------------------------------------------------------------
# Plain-JAX reference (mirrors the kernels' bf16/f32 mixed precision)
# ----------------------------------------------------------------------------
def reference_forward(x, edge_index, batch, params, num_graphs, *, fold_xw):
    n = x.shape[0]
    a = build_norm_adj(edge_index, n).astype(jnp.bfloat16)
    pool = build_pool_matrix(batch, num_graphs, n)
    h = x.astype(jnp.bfloat16)
    for (w, b, gamma, beta, apply_act) in params:
        wb = w.astype(jnp.bfloat16)
        if fold_xw:   # (A_hat @ X) @ W  -- tiled-kernel association
            ax = jnp.dot(a, h, preferred_element_type=jnp.float32)
            hf = jnp.dot(ax.astype(jnp.bfloat16), wb, preferred_element_type=jnp.float32)
        else:         # A_hat @ (X @ W)  -- fused-kernel association
            xw = jnp.dot(h, wb, preferred_element_type=jnp.float32)
            hf = jnp.dot(a, xw.astype(jnp.bfloat16), preferred_element_type=jnp.float32)
        hf = hf + b[None, :]
        if apply_act:
            hf = jnp.maximum(hf, 0.0)
            mean = jnp.mean(hf, axis=-1, keepdims=True)
            var = jnp.mean((hf - mean) ** 2, axis=-1, keepdims=True)
            hf = (hf - mean) * jax.lax.rsqrt(var + 1e-5)
            hf = hf * gamma[None, :] + beta[None, :]
            h = hf.astype(jnp.bfloat16)
        else:
            h = hf
    z = jnp.dot(pool.astype(jnp.bfloat16), h.astype(jnp.bfloat16),
                preferred_element_type=jnp.float32)
    return h.astype(jnp.float32), z


# ----------------------------------------------------------------------------
# Demo
# ----------------------------------------------------------------------------
def ring_graph_batch(num_graphs, nodes_per_graph):
    edges = []
    for g in range(num_graphs):
        off = g * nodes_per_graph
        for v in range(nodes_per_graph):
            u, w = off + v, off + (v + 1) % nodes_per_graph
            edges.append((u, w))
            edges.append((w, u))
    edge_index = jnp.array(edges, dtype=jnp.int32).T               # [2, E]
    batch = jnp.repeat(jnp.arange(num_graphs, dtype=jnp.int32), nodes_per_graph)
    return edge_index, batch


if __name__ == "__main__":
    key = jax.random.PRNGKey(0)

    in_channels_node = 8
    out_channels = 8
    num_layers = 2

    key, kparam = jax.random.split(key)
    params = init_params(kparam, in_channels_node, out_channels, num_layers)

    # --- small demo graph: fully-fused single-kernel path --------------------
    num_graphs = 2
    nodes_per_graph = 8
    num_nodes = num_graphs * nodes_per_graph
    edge_index, batch = ring_graph_batch(num_graphs, nodes_per_graph)
    key, kx = jax.random.split(key)
    x = jax.random.normal(kx, (num_nodes, in_channels_node), jnp.float32)

    h_out, z_out = gcn_encoder_forward(x, edge_index, batch, params, num_graphs)
    jax.block_until_ready((h_out, z_out))
    assert h_out.shape == (num_nodes, out_channels)
    assert z_out.shape == (num_graphs, out_channels)

    h_ref, z_ref = reference_forward(x, edge_index, batch, params, num_graphs,
                                     fold_xw=False)
    np.testing.assert_allclose(np.asarray(h_out), np.asarray(h_ref), rtol=2e-2, atol=2e-2)
    np.testing.assert_allclose(np.asarray(z_out), np.asarray(z_ref), rtol=2e-2, atol=2e-2)

    # --- medium graph (N=400): now picked up by the raised fused threshold ---
    num_graphs_m = 2
    nodes_per_graph_m = 200
    num_nodes_m = num_graphs_m * nodes_per_graph_m
    edge_index_m, batch_m = ring_graph_batch(num_graphs_m, nodes_per_graph_m)
    key, kxm = jax.random.split(key)
    xm = jax.random.normal(kxm, (num_nodes_m, in_channels_node), jnp.float32)
    assert _fused_vmem_bytes(num_nodes_m, in_channels_node, params,
                             num_graphs_m) <= _FUSED_VMEM_BUDGET
    hm, zm = gcn_encoder_forward(xm, edge_index_m, batch_m, params, num_graphs_m)
    jax.block_until_ready((hm, zm))
    hm_ref, zm_ref = reference_forward(xm, edge_index_m, batch_m, params,
                                       num_graphs_m, fold_xw=False)
    np.testing.assert_allclose(np.asarray(hm), np.asarray(hm_ref), rtol=2e-2, atol=2e-2)
    np.testing.assert_allclose(np.asarray(zm), np.asarray(zm_ref), rtol=2e-2, atol=2e-2)

    # --- larger graph: tiled / pipelined path (N=1200 -> padded 1536, 3x3 grid
    #     of 512x512 tiles, lane-unpadded layer-1 X) ---------------------------
    num_graphs_b = 2
    nodes_per_graph_b = 600
    num_nodes_b = num_graphs_b * nodes_per_graph_b
    edge_index_b, batch_b = ring_graph_batch(num_graphs_b, nodes_per_graph_b)
    key, kxb = jax.random.split(key)
    xb = jax.random.normal(kxb, (num_nodes_b, in_channels_node), jnp.float32)

    hb, zb = gcn_encoder_forward(xb, edge_index_b, batch_b, params, num_graphs_b,
                                 mode="tiled", tile_m=512, tile_k=512)
    jax.block_until_ready((hb, zb))
    assert hb.shape == (num_nodes_b, out_channels)
    assert zb.shape == (num_graphs_b, out_channels)

    hb_ref, zb_ref = reference_forward(xb, edge_index_b, batch_b, params,
                                       num_graphs_b, fold_xw=True)
    np.testing.assert_allclose(np.asarray(hb), np.asarray(hb_ref), rtol=2e-2, atol=2e-2)
    np.testing.assert_allclose(np.asarray(zb), np.asarray(zb_ref), rtol=2e-2, atol=2e-2)

    print("KERNEL_OK")
</pallas_src>

<mosaic_0001>
module attributes {stable_mosaic.version = 11 : i64} {
  func.func @_fused_encoder_kernel(%arg0: i32, %arg1: memref<16x16xbf16, #tpu.memory_space<vmem>>, %arg2: memref<16x128xbf16, #tpu.memory_space<vmem>>, %arg3: memref<8x16xbf16, #tpu.memory_space<vmem>>, %arg4: memref<128x128xbf16, #tpu.memory_space<vmem>>, %arg5: memref<1x128xf32, #tpu.memory_space<vmem>>, %arg6: memref<1x128xf32, #tpu.memory_space<vmem>>, %arg7: memref<1x128xf32, #tpu.memory_space<vmem>>, %arg8: memref<128x128xbf16, #tpu.memory_space<vmem>>, %arg9: memref<1x128xf32, #tpu.memory_space<vmem>>, %arg10: memref<1x128xf32, #tpu.memory_space<vmem>>, %arg11: memref<1x128xf32, #tpu.memory_space<vmem>>, %arg12: memref<16x128xf32, #tpu.memory_space<vmem>>, %arg13: memref<8x128xf32, #tpu.memory_space<vmem>>) attributes {dimension_semantics = [#tpu.dimension_semantics<arbitrary>], iteration_bounds = array<i64: 1>, scalar_prefetch = 0 : i64, scratch_operands = 0 : i64, tpu.core_type = #tpu.core_type<tc>, window_params = [{pipeline_mode = #tpu.pipeline_mode<synchronous>, transform_indices = @transform_0, window_bounds = array<i64: 16, 16>}, {pipeline_mode = #tpu.pipeline_mode<synchronous>, transform_indices = @transform_1, window_bounds = array<i64: 16, 128>}, {pipeline_mode = #tpu.pipeline_mode<synchronous>, transform_indices = @transform_2, window_bounds = array<i64: 8, 16>}, {pipeline_mode = #tpu.pipeline_mode<synchronous>, transform_indices = @transform_3, window_bounds = array<i64: 128, 128>}, {pipeline_mode = #tpu.pipeline_mode<synchronous>, transform_indices = @transform_4, window_bounds = array<i64: 1, 128>}, {pipeline_mode = #tpu.pipeline_mode<synchronous>, transform_indices = @transform_5, window_bounds = array<i64: 1, 128>}, {pipeline_mode = #tpu.pipeline_mode<synchronous>, transform_indices = @transform_6, window_bounds = array<i64: 1, 128>}, {pipeline_mode = #tpu.pipeline_mode<synchronous>, transform_indices = @transform_7, window_bounds = array<i64: 128, 128>}, {pipeline_mode = #tpu.pipeline_mode<synchronous>, transform_indices = @transform_8, window_bounds = array<i64: 1, 128>}, {pipeline_mode = #tpu.pipeline_mode<synchronous>, transform_indices = @transform_9, window_bounds = array<i64: 1, 128>}, {pipeline_mode = #tpu.pipeline_mode<synchronous>, transform_indices = @transform_10, window_bounds = array<i64: 1, 128>}, {pipeline_mode = #tpu.pipeline_mode<synchronous>, transform_indices = @transform_11, window_bounds = array<i64: 16, 128>}, {pipeline_mode = #tpu.pipeline_mode<synchronous>, transform_indices = @transform_12, window_bounds = array<i64: 8, 128>}]} {
    %c0 = arith.constant 0 : index
    %c0_0 = arith.constant 0 : index
    %0 = vector.load %arg1[%c0, %c0_0] : memref<16x16xbf16, #tpu.memory_space<vmem>>, vector<16x16xbf16>
    %c0_1 = arith.constant 0 : index
    %c0_2 = arith.constant 0 : index
    %1 = vector.load %arg2[%c0_1, %c0_2] : memref<16x128xbf16, #tpu.memory_space<vmem>>, vector<16x128xbf16>
    %c0_3 = arith.constant 0 : index
    %c0_4 = arith.constant 0 : index
    %2 = vector.load %arg4[%c0_3, %c0_4] : memref<128x128xbf16, #tpu.memory_space<vmem>>, vector<128x128xbf16>
    %cst = arith.constant dense<0.000000e+00> : vector<16x128xf32>
    %3 = tpu.matmul %1, %2, %cst {dimension_numbers = #tpu.dot_dimension_numbers<[1], [0], [0], [1], [0, 0, 1, 1], [], []>} : vector<16x128xbf16>, vector<128x128xbf16>, vector<16x128xf32> -> vector<16x128xf32>
    %4 = arith.truncf %3 : vector<16x128xf32> to vector<16x128xbf16>
    %cst_5 = arith.constant dense<0.000000e+00> : vector<16x128xf32>
    %5 = tpu.matmul %0, %4, %cst_5 {dimension_numbers = #tpu.dot_dimension_numbers<[1], [0], [0], [1], [0, 0, 1, 1], [], []>} : vector<16x16xbf16>, vector<16x128xbf16>, vector<16x128xf32> -> vector<16x128xf32>
    %c0_6 = arith.constant 0 : index
    %c0_7 = arith.constant 0 : index
    %6 = vector.load %arg5[%c0_6, %c0_7] : memref<1x128xf32, #tpu.memory_space<vmem>>, vector<1x128xf32>
    %7 = vector.broadcast %6 : vector<1x128xf32> to vector<16x128xf32>
    %8 = arith.addf %5, %7 : vector<16x128xf32>
    %cst_8 = arith.constant 0.000000e+00 : f32
    %9 = vector.broadcast %cst_8 : f32 to vector<16x128xf32>
    %10 = arith.maximumf %8, %9 : vector<16x128xf32>
    %c0_9 = arith.constant 0 : index
    %c0_10 = arith.constant 0 : index
    %11 = vector.load %arg6[%c0_9, %c0_10] : memref<1x128xf32, #tpu.memory_space<vmem>>, vector<1x128xf32>
    %c0_11 = arith.constant 0 : index
    %c0_12 = arith.constant 0 : index
    %12 = vector.load %arg7[%c0_11, %c0_12] : memref<1x128xf32, #tpu.memory_space<vmem>>, vector<1x128xf32>
    %13 = tpu.iota {dimensions = array<i32: 1>} : vector<16x128xi32>
    %c16_i32 = arith.constant 16 : i32
    %14 = vector.broadcast %c16_i32 : i32 to vector<16x128xi32>
    %15 = arith.cmpi slt, %13, %14 : vector<16x128xi32>
    %16 = arith.extui %15 : vector<16x128xi1> to vector<16x128xi32>
    %17 = arith.sitofp %16 : vector<16x128xi32> to vector<16x128xf32>
    %18 = arith.mulf %10, %17 : vector<16x128xf32>
    %cst_13 = arith.constant dense<0.000000e+00> : vector<16xf32>
    %19 = vector.multi_reduction <add>, %18, %cst_13 [1] : vector<16x128xf32> to vector<16xf32>
    %20 = vector.shape_cast %19 : vector<16xf32> to vector<16x1xf32>
    %cst_14 = arith.constant 6.250000e-02 : f32
    %21 = vector.broadcast %cst_14 : f32 to vector<16x1xf32>
    %22 = arith.mulf %20, %21 : vector<16x1xf32>
    %23 = vector.broadcast %22 : vector<16x1xf32> to vector<16x128xf32>
    %24 = arith.subf %10, %23 : vector<16x128xf32>
    %25 = arith.mulf %24, %17 : vector<16x128xf32>
    %26 = arith.mulf %25, %25 : vector<16x128xf32>
    %cst_15 = arith.constant dense<0.000000e+00> : vector<16xf32>
    %27 = vector.multi_reduction <add>, %26, %cst_15 [1] : vector<16x128xf32> to vector<16xf32>
    %28 = vector.shape_cast %27 : vector<16xf32> to vector<16x1xf32>
    %cst_16 = arith.constant 6.250000e-02 : f32
    %29 = vector.broadcast %cst_16 : f32 to vector<16x1xf32>
    %30 = arith.mulf %28, %29 : vector<16x1xf32>
    %31 = vector.broadcast %22 : vector<16x1xf32> to vector<16x128xf32>
    %32 = arith.subf %10, %31 : vector<16x128xf32>
    %cst_17 = arith.constant 9.99999974E-6 : f32
    %33 = vector.broadcast %cst_17 : f32 to vector<16x1xf32>
    %34 = arith.addf %30, %33 : vector<16x1xf32>
    %35 = math.rsqrt %34 : vector<16x1xf32>
    %36 = vector.broadcast %35 : vector<16x1xf32> to vector<16x128xf32>
    %37 = arith.mulf %32, %36 : vector<16x128xf32>
    %38 = vector.broadcast %11 : vector<1x128xf32> to vector<16x128xf32>
    %39 = arith.mulf %37, %38 : vector<16x128xf32>
    %40 = vector.broadcast %12 : vector<1x128xf32> to vector<16x128xf32>
    %41 = arith.addf %39, %40 : vector<16x128xf32>
    %42 = arith.truncf %41 : vector<16x128xf32> to vector<16x128xbf16>
    %c0_18 = arith.constant 0 : index
    %c0_19 = arith.constant 0 : index
    %43 = vector.load %arg8[%c0_18, %c0_19] : memref<128x128xbf16, #tpu.memory_space<vmem>>, vector<128x128xbf16>
    %cst_20 = arith.constant dense<0.000000e+00> : vector<16x128xf32>
    %44 = tpu.matmul %42, %43, %cst_20 {dimension_numbers = #tpu.dot_dimension_numbers<[1], [0], [0], [1], [0, 0, 1, 1], [], []>} : vector<16x128xbf16>, vector<128x128xbf16>, vector<16x128xf32> -> vector<16x128xf32>
    %45 = arith.truncf %44 : vector<16x128xf32> to vector<16x128xbf16>
    %cst_21 = arith.constant dense<0.000000e+00> : vector<16x128xf32>
    %46 = tpu.matmul %0, %45, %cst_21 {dimension_numbers = #tpu.dot_dimension_numbers<[1], [0], [0], [1], [0, 0, 1, 1], [], []>} : vector<16x16xbf16>, vector<16x128xbf16>, vector<16x128xf32> -> vector<16x128xf32>
    %c0_22 = arith.constant 0 : index
    %c0_23 = arith.constant 0 : index
    %47 = vector.load %arg9[%c0_22, %c0_23] : memref<1x128xf32, #tpu.memory_space<vmem>>, vector<1x128xf32>
    %48 = vector.broadcast %47 : vector<1x128xf32> to vector<16x128xf32>
    %49 = arith.addf %46, %48 : vector<16x128xf32>
    %c0_24 = arith.constant 0 : index
    %c0_25 = arith.constant 0 : index
    %50 = vector.load %arg12[%c0_24, %c0_25] : memref<16x128xf32, #tpu.memory_space<vmem>>, vector<16x128xf32>
    tpu.vector_store %arg12[%c0_24, %c0_25], %49 {strides = array<i32>} : memref<16x128xf32, #tpu.memory_space<vmem>>, vector<16x128xf32>,
    %c0_26 = arith.constant 0 : index
    %c0_27 = arith.constant 0 : index
    %51 = vector.load %arg3[%c0_26, %c0_27] : memref<8x16xbf16, #tpu.memory_space<vmem>>, vector<8x16xbf16>
    %52 = arith.truncf %49 : vector<16x128xf32> to vector<16x128xbf16>
    %cst_28 = arith.constant dense<0.000000e+00> : vector<8x128xf32>
    %53 = tpu.matmul %51, %52, %cst_28 {dimension_numbers = #tpu.dot_dimension_numbers<[1], [0], [0], [1], [0, 0, 1, 1], [], []>} : vector<8x16xbf16>, vector<16x128xbf16>, vector<8x128xf32> -> vector<8x128xf32>
    %c0_29 = arith.constant 0 : index
    %c0_30 = arith.constant 0 : index
    %54 = vector.load %arg13[%c0_29, %c0_30] : memref<8x128xf32, #tpu.memory_space<vmem>>, vector<8x128xf32>
    tpu.vector_store %arg13[%c0_29, %c0_30], %53 {strides = array<i32>} : memref<8x128xf32, #tpu.memory_space<vmem>>, vector<8x128xf32>,
    return
  }
  func.func @transform_0(%arg0: i32) -> (i32, i32) {
    %c0_i32 = arith.constant 0 : i32
    %c0_i32_0 = arith.constant 0 : i32
    %c0_i32_1 = arith.constant 0 : i32
    return %c0_i32, %c0_i32_0 : i32, i32
  }
  func.func @transform_1(%arg0: i32) -> (i32, i32) {
    %c0_i32 = arith.constant 0 : i32
    %c0_i32_0 = arith.constant 0 : i32
    %c0_i32_1 = arith.constant 0 : i32
    return %c0_i32, %c0_i32_0 : i32, i32
  }
  func.func @transform_2(%arg0: i32) -> (i32, i32) {
    %c0_i32 = arith.constant 0 : i32
    %c0_i32_0 = arith.constant 0 : i32
    %c0_i32_1 = arith.constant 0 : i32
    return %c0_i32, %c0_i32_0 : i32, i32
  }
  func.func @transform_3(%arg0: i32) -> (i32, i32) {
    %c0_i32 = arith.constant 0 : i32
    %c0_i32_0 = arith.constant 0 : i32
    %c0_i32_1 = arith.constant 0 : i32
    return %c0_i32, %c0_i32_0 : i32, i32
  }
  func.func @transform_4(%arg0: i32) -> (i32, i32) {
    %c0_i32 = arith.constant 0 : i32
    %c0_i32_0 = arith.constant 0 : i32
    %c0_i32_1 = arith.constant 0 : i32
    return %c0_i32, %c0_i32_0 : i32, i32
  }
  func.func @transform_5(%arg0: i32) -> (i32, i32) {
    %c0_i32 = arith.constant 0 : i32
    %c0_i32_0 = arith.constant 0 : i32
    %c0_i32_1 = arith.constant 0 : i32
    return %c0_i32, %c0_i32_0 : i32, i32
  }
  func.func @transform_6(%arg0: i32) -> (i32, i32) {
    %c0_i32 = arith.constant 0 : i32
    %c0_i32_0 = arith.constant 0 : i32
    %c0_i32_1 = arith.constant 0 : i32
    return %c0_i32, %c0_i32_0 : i32, i32
  }
  func.func @transform_7(%arg0: i32) -> (i32, i32) {
    %c0_i32 = arith.constant 0 : i32
    %c0_i32_0 = arith.constant 0 : i32
    %c0_i32_1 = arith.constant 0 : i32
    return %c0_i32, %c0_i32_0 : i32, i32
  }
  func.func @transform_8(%arg0: i32) -> (i32, i32) {
    %c0_i32 = arith.constant 0 : i32
    %c0_i32_0 = arith.constant 0 : i32
    %c0_i32_1 = arith.constant 0 : i32
    return %c0_i32, %c0_i32_0 : i32, i32
  }
  func.func @transform_9(%arg0: i32) -> (i32, i32) {
    %c0_i32 = arith.constant 0 : i32
    %c0_i32_0 = arith.constant 0 : i32
    %c0_i32_1 = arith.constant 0 : i32
    return %c0_i32, %c0_i32_0 : i32, i32
  }
  func.func @transform_10(%arg0: i32) -> (i32, i32) {
    %c0_i32 = arith.constant 0 : i32
    %c0_i32_0 = arith.constant 0 : i32
    %c0_i32_1 = arith.constant 0 : i32
    return %c0_i32, %c0_i32_0 : i32, i32
  }
  func.func @transform_11(%arg0: i32) -> (i32, i32) {
    %c0_i32 = arith.constant 0 : i32
    %c0_i32_0 = arith.constant 0 : i32
    %c0_i32_1 = arith.constant 0 : i32
    return %c0_i32, %c0_i32_0 : i32, i32
  }
  func.func @transform_12(%arg0: i32) -> (i32, i32) {
    %c0_i32 = arith.constant 0 : i32
    %c0_i32_0 = arith.constant 0 : i32
    %c0_i32_1 = arith.constant 0 : i32
    return %c0_i32, %c0_i32_0 : i32, i32
  }
}

</mosaic_0001>

<llo_original>
// kernel: tpu_custom_call.1
$region0: #{tpu_custom_call.1}
  #allocation0 [shape = 'u32[]', space=smem, size = 0x4, offset = 0x4, fixed_abs, tag = 'smem constant byte address 0x4 - core index']
  #allocation1 [shape = 'u32[144,128]{1,0:T(1,128)}', space=vmem, size = 0x12000, scoped, tag = 'internal scratch']
  %s0 = inlined_call_operand.hbm [shape: bf16[16,16], index: 0, kind: input, shape index: {}]
  %s1 = inlined_call_operand.hbm [shape: bf16[16,128], index: 1, kind: input, shape index: {}]
  %s2 = inlined_call_operand.hbm [shape: bf16[8,16], index: 2, kind: input, shape index: {}]
  %s3 = inlined_call_operand.hbm [shape: bf16[128,128], index: 3, kind: input, shape index: {}]
  %s4 = inlined_call_operand.vmem [shape: f32[1,128], index: 4, kind: input, shape index: {}]
  %s5 = inlined_call_operand.vmem [shape: f32[1,128], index: 5, kind: input, shape index: {}]
  %s6 = inlined_call_operand.vmem [shape: f32[1,128], index: 6, kind: input, shape index: {}]
  %s7 = inlined_call_operand.hbm [shape: bf16[128,128], index: 7, kind: input, shape index: {}]
  %s8 = inlined_call_operand.vmem [shape: f32[1,128], index: 8, kind: input, shape index: {}]
  %s9 = inlined_call_operand.vmem [shape: f32[1,128], index: 9, kind: input, shape index: {}]
  %s10 = inlined_call_operand.vmem [shape: f32[1,128], index: 10, kind: input, shape index: {}]
  %s11 = inlined_call_operand.hbm [shape: f32[16,128], index: 11, kind: output, shape index: {0}]
  %s12 = inlined_call_operand.hbm [shape: f32[8,128], index: 12, kind: output, shape index: {1}]
  %13 = xla_tuple %s11, %s12
  %s14 = sld [smem:[#allocation0]]
  $region82: #{tpu_custom_call.1} parent=0
    _
  %s16 = ssub.s32 1, %s14
  %s17 = scalar_select 0, %s16, %s14
  $region1: #{tpu_custom_call.1} parent=0
    #allocation2 [shape = 'u8[4096]{0}', space=vmem, size = 0x1000, scoped, tag = 'input window, operand 0, single buffered']
    #allocation3 [shape = 's32[1]{0}', space=sflag, size = 0x4, scoped, tag = 'scoped memory for tpu_custom_call.1']
    #allocation4 [shape = 's32[1]{0}', space=sflag, size = 0x4, scoped, tag = 'scoped memory for tpu_custom_call.1']
    #allocation5 [shape = 'u8[4096]{0}', space=vmem, size = 0x1000, scoped, tag = 'input window, operand 1, single buffered']
    #allocation6 [shape = 's32[1]{0}', space=sflag, size = 0x4, scoped, tag = 'scoped memory for tpu_custom_call.1']
    #allocation7 [shape = 'u8[2048]{0}', space=vmem, size = 0x800, scoped, tag = 'input window, operand 2, single buffered']
    #allocation8 [shape = 'u8[32768]{0}', space=vmem, size = 0x8000, scoped, tag = 'input window, operand 3, single buffered']
    #allocation9 [shape = 's32[1]{0}', space=sflag, size = 0x4, scoped, tag = 'scoped memory for tpu_custom_call.1']
    #allocation10 [shape = 'u8[32768]{0}', space=vmem, size = 0x8000, scoped, tag = 'input window, operand 7, single buffered']
    #allocation11 [shape = 'u8[8192]{0}', space=vmem, size = 0x2000, scoped, tag = 'output window, operand 0, single buffered']
    #allocation12 [shape = 'u8[4096]{0}', space=vmem, size = 0x1000, scoped, tag = 'output window, operand 1, single buffered']
    #allocation13 [shape = 's32[1]{0}', space=sflag, size = 0x4, scoped, tag = 'scoped memory for tpu_custom_call.1']
    %18 = vsyncpa [#allocation3], 0
    %19 = vsyncpa [#allocation6], 0
    %20 = vsyncpa [#allocation9], 0
    %21 = vsyncpa [#allocation4], 0
    %22 = vsyncpa [#allocation13], 0
    // Predicated region
    $region2: #{tpu_custom_call.1} parent=1 // pred_check
      _
    $region3: #{tpu_custom_call.1} parent=1 // pred_check_branch
      %24 = sbr.rel (0) target = $region5
    $region4: #{tpu_custom_call.1} parent=1 // pred_region
      %s26 = ssub.s32 128, 128
      %27 = vsyncadd [#allocation3], %s26
      %s28 = sshll.u32 [#allocation2], 4
      %s29 = int_to_ptr.vmem [resolvable:$true] %s28
      %34 = dma.hbm_to_vmem [thread:$0]  %s0, 128, %s29, [#allocation3], 64, 64, 4
    $region5: #{tpu_custom_call.1} parent=1 // pred_fallthru
      _
    // Predicated region
    $region6: #{tpu_custom_call.1} parent=1 // pred_check
      _
    $region7: #{tpu_custom_call.1} parent=1 // pred_check_branch
      %36 = sbr.rel (0) target = $region9
    $region8: #{tpu_custom_call.1} parent=1 // pred_region
      %s38 = ssub.s32 128, 128
      %39 = vsyncadd [#allocation6], %s38
      %s40 = sshll.u32 [#allocation5], 4
      %s41 = int_to_ptr.vmem [resolvable:$true] %s40
      %46 = dma.hbm_to_vmem [thread:$0]  %s1, 128, %s41, [#allocation6], 64, 64, 4
    $region9: #{tpu_custom_call.1} parent=1 // pred_fallthru
      _
    // Predicated region
    $region10: #{tpu_custom_call.1} parent=1 // pred_check
      _
    $region11: #{tpu_custom_call.1} parent=1 // pred_check_branch
      %48 = sbr.rel (0) target = $region13
    $region12: #{tpu_custom_call.1} parent=1 // pred_region
      %s50 = ssub.s32 64, 64
      %51 = vsyncadd [#allocation6], %s50
      %s53 = sshll.u32 [#allocation7], 4
      %s54 = int_to_ptr.vmem [resolvable:$true] %s53
      %56 = dma.hbm_to_vmem [thread:$0]  %s2, 64, %s54, [#allocation6]
    $region13: #{tpu_custom_call.1} parent=1 // pred_fallthru
      _
    // Predicated region
    $region14: #{tpu_custom_call.1} parent=1 // pred_check
      _
    $region15: #{tpu_custom_call.1} parent=1 // pred_check_branch
      %58 = sbr.rel (0) target = $region17
    $region16: #{tpu_custom_call.1} parent=1 // pred_region
      %s60 = ssub.s32 1024, 1024
      %61 = vsyncadd [#allocation9], %s60
      %s62 = sshll.u32 [#allocation8], 4
      %s63 = int_to_ptr.vmem [resolvable:$true] %s62
      %68 = dma.hbm_to_vmem [thread:$0]  %s3, 1024, %s63, [#allocation9], 64, 64, 4
    $region17: #{tpu_custom_call.1} parent=1 // pred_fallthru
      _
    // Predicated region
    $region18: #{tpu_custom_call.1} parent=1 // pred_check
      _
    $region19: #{tpu_custom_call.1} parent=1 // pred_check_branch
      %70 = sbr.rel (0) target = $region21
    $region20: #{tpu_custom_call.1} parent=1 // pred_region
      _
    $region21: #{tpu_custom_call.1} parent=1 // pred_fallthru
      _
    // Predicated region
    $region22: #{tpu_custom_call.1} parent=1 // pred_check
      _
    $region23: #{tpu_custom_call.1} parent=1 // pred_check_branch
      %72 = sbr.rel (0) target = $region25
    $region24: #{tpu_custom_call.1} parent=1 // pred_region
      _
    $region25: #{tpu_custom_call.1} parent=1 // pred_fallthru
      _
    // Predicated region
    $region26: #{tpu_custom_call.1} parent=1 // pred_check
      _
    $region27: #{tpu_custom_call.1} parent=1 // pred_check_branch
      %74 = sbr.rel (0) target = $region29
    $region28: #{tpu_custom_call.1} parent=1 // pred_region
      _
    $region29: #{tpu_custom_call.1} parent=1 // pred_fallthru
      _
    // Predicated region
    $region30: #{tpu_custom_call.1} parent=1 // pred_check
      _
    $region31: #{tpu_custom_call.1} parent=1 // pred_check_branch
      %76 = sbr.rel (0) target = $region33
    $region32: #{tpu_custom_call.1} parent=1 // pred_region
      %s78 = ssub.s32 1024, 1024
      %79 = vsyncadd [#allocation9], %s78
      %s80 = sshll.u32 [#allocation10], 4
      %s81 = int_to_ptr.vmem [resolvable:$true] %s80
      %86 = dma.hbm_to_vmem [thread:$0]  %s7, 1024, %s81, [#allocation9], 64, 64, 4
    $region33: #{tpu_custom_call.1} parent=1 // pred_fallthru
      _
    // Predicated region
    $region34: #{tpu_custom_call.1} parent=1 // pred_check
      _
    $region35: #{tpu_custom_call.1} parent=1 // pred_check_branch
      %88 = sbr.rel (0) target = $region37
    $region36: #{tpu_custom_call.1} parent=1 // pred_region
      _
    $region37: #{tpu_custom_call.1} parent=1 // pred_fallthru
      _
    // Predicated region
    $region38: #{tpu_custom_call.1} parent=1 // pred_check
      _
    $region39: #{tpu_custom_call.1} parent=1 // pred_check_branch
      %90 = sbr.rel (0) target = $region41
    $region40: #{tpu_custom_call.1} parent=1 // pred_region
      _
    $region41: #{tpu_custom_call.1} parent=1 // pred_fallthru
      _
    // Predicated region
    $region42: #{tpu_custom_call.1} parent=1 // pred_check
      _
    $region43: #{tpu_custom_call.1} parent=1 // pred_check_branch
      %92 = sbr.rel (0) target = $region45
    $region44: #{tpu_custom_call.1} parent=1 // pred_region
      _
    $region45: #{tpu_custom_call.1} parent=1 // pred_fallthru
      _
    // Predicated region
    $region46: #{tpu_custom_call.1} parent=1 // pred_check
      _
    $region47: #{tpu_custom_call.1} parent=1 // pred_check_branch
      %94 = sbr.rel (0) target = $region49
    $region48: #{tpu_custom_call.1} parent=1 // pred_region
      %95 = dma.done [#allocation3], 128
    $region49: #{tpu_custom_call.1} parent=1 // pred_fallthru
      _
    // Predicated region
    $region50: #{tpu_custom_call.1} parent=1 // pred_check
      _
    $region51: #{tpu_custom_call.1} parent=1 // pred_check_branch
      %97 = sbr.rel (0) target = $region53
    $region52: #{tpu_custom_call.1} parent=1 // pred_region
      %98 = dma.done [#allocation6], 128
    $region53: #{tpu_custom_call.1} parent=1 // pred_fallthru
      _
    // Predicated region
    $region54: #{tpu_custom_call.1} parent=1 // pred_check
      _
    $region55: #{tpu_custom_call.1} parent=1 // pred_check_branch
      %100 = sbr.rel (0) target = $region57
    $region56: #{tpu_custom_call.1} parent=1 // pred_region
      %101 = dma.done [#allocation6], 64
    $region57: #{tpu_custom_call.1} parent=1 // pred_fallthru
      _
    // Predicated region
    $region58: #{tpu_custom_call.1} parent=1 // pred_check
      _
    $region59: #{tpu_custom_call.1} parent=1 // pred_check_branch
      %103 = sbr.rel (0) target = $region61
    $region60: #{tpu_custom_call.1} parent=1 // pred_region
      %104 = dma.done [#allocation9], 1024
    $region61: #{tpu_custom_call.1} parent=1 // pred_fallthru
      _
    // Predicated region
    $region62: #{tpu_custom_call.1} parent=1 // pred_check
      _
    $region63: #{tpu_custom_call.1} parent=1 // pred_check_branch
      %106 = sbr.rel (0) target = $region65
    $region64: #{tpu_custom_call.1} parent=1 // pred_region
      %107 = dma.done [#allocation9], 1024
    $region65: #{tpu_custom_call.1} parent=1 // pred_fallthru
      _
    %v109 = vld [vmem:[#allocation2] sm:$0xf]
    %v110 = vld [vmem:[#allocation2 + $0x4] sm:$0xf]
    %v111 = vld [vmem:[#allocation5] sm:$0xf]
    %v112 = vld [vmem:[#allocation5 + $0x4] sm:$0xf]
    %v113 = vld [vmem:[#allocation8] sm:$0xf]
    %v114 = vld [vmem:[#allocation8 + $0x4] sm:$0xf]
    %v115 = vld [vmem:[#allocation8 + $0x8] sm:$0xf]
    %v116 = vld [vmem:[#allocation8 + $0xc] sm:$0xf]
    %v117 = vld [vmem:[#allocation8 + $0x10] sm:$0xf]
    %v118 = vld [vmem:[#allocation8 + $0x14] sm:$0xf]
    %v119 = vld [vmem:[#allocation8 + $0x18] sm:$0xf]
    %v120 = vld [vmem:[#allocation8 + $0x1c] sm:$0xf]
    %v121 = vld [vmem:[#allocation8 + $0x20] sm:$0xf]
    %v122 = vld [vmem:[#allocation8 + $0x24] sm:$0xf]
    %v123 = vld [vmem:[#allocation8 + $0x28] sm:$0xf]
    %v124 = vld [vmem:[#allocation8 + $0x2c] sm:$0xf]
    %v125 = vld [vmem:[#allocation8 + $0x30] sm:$0xf]
    %v126 = vld [vmem:[#allocation8 + $0x34] sm:$0xf]
    %v127 = vld [vmem:[#allocation8 + $0x38] sm:$0xf]
    %v128 = vld [vmem:[#allocation8 + $0x3c] sm:$0xf]
    %v131 = vunpack.c.l.b16 %v111
    %v132 = vunpack.c.l.b16 %v112
    %v133 = vpack.c.b16 %v132, %v131
    %v151 = vunpack.c.l.b16 %v113
    %v152 = vunpack.c.l.b16 %v114
    %v153 = vunpack.c.l.b16 %v115
    %v154 = vunpack.c.l.b16 %v116
    %v155 = vunpack.c.l.b16 %v117
    %v156 = vunpack.c.l.b16 %v118
    %v157 = vunpack.c.l.b16 %v119
    %v158 = vunpack.c.l.b16 %v120
    %v159 = vunpack.c.l.b16 %v121
    %v160 = vunpack.c.l.b16 %v122
    %v161 = vunpack.c.l.b16 %v123
    %v162 = vunpack.c.l.b16 %v124
    %v163 = vunpack.c.l.b16 %v125
    %v164 = vunpack.c.l.b16 %v126
    %v165 = vunpack.c.l.b16 %v127
    %v166 = vunpack.c.l.b16 %v128
    %v167 = vpack.c.b16 %v152, %v151
    %v168 = vpack.c.b16 %v154, %v153
    %v169 = vpack.c.b16 %v156, %v155
    %v170 = vpack.c.b16 %v158, %v157
    %v171 = vpack.c.b16 %v160, %v159
    %v172 = vpack.c.b16 %v162, %v161
    %v173 = vpack.c.b16 %v164, %v163
    %v174 = vpack.c.b16 %v166, %v165
    %183 = vmatprep.subr.bf16.mxu0 0
    %184 = vmatpush1.bf16.msra.mxu0 %v174
    %185 = vmatprep.subr.bf16.mxu0 0
    %186 = vmatpush1.bf16.msra.mxu0 %v173
    %187 = vmatprep.subr.bf16.mxu0 0
    %188 = vmatpush1.bf16.msra.mxu0 %v172
    %189 = vmatprep.subr.bf16.mxu0 0
    %190 = vmatpush1.bf16.msra.mxu0 %v171
    %191 = vmatprep.subr.bf16.mxu0 0
    %192 = vmatpush1.bf16.msra.mxu0 %v170
    %193 = vmatprep.subr.bf16.mxu0 0
    %194 = vmatpush1.bf16.msra.mxu0 %v169
    %195 = vmatprep.subr.bf16.mxu0 0
    %196 = vmatpush1.bf16.msra.mxu0 %v168
    %197 = vmatprep.subr.bf16.mxu0 0
    %198 = vmatpush1.bf16.msra.mxu0 %v167
    %199 = vmatprep.subr.bf16.mxu0 0
    %200 = vmatpush2.bf16.msra.mxu0 0
    %201 = vmatprep.subr.bf16.mxu0 0
    %202 = vmatpush2.bf16.msra.mxu0 0
    %203 = vmatprep.subr.bf16.mxu0 0
    %204 = vmatpush2.bf16.msra.mxu0 0
    %205 = vmatprep.subr.bf16.mxu0 0
    %206 = vmatpush2.bf16.msra.mxu0 0
    %207 = vmatprep.subr.bf16.mxu0 0
    %208 = vmatpush2.bf16.msra.mxu0 0
    %209 = vmatprep.subr.bf16.mxu0 0
    %210 = vmatpush2.bf16.msra.mxu0 0
    %211 = vmatprep.subr.bf16.mxu0 0
    %212 = vmatpush2.bf16.msra.mxu0 0
    %213 = vmatprep.subr.bf16.mxu0 0
    %214 = vmatpush2.bf16.msra.mxu0 0
    %215 = vmatprep.mubr.bf16.mxu0 0
    %216 = vmatmul.mubr.bf16.gmra.mxu0 %v133
    %v217 = vpop.f32.mrf.mxu0
    %v218 = vadd.f32 0.0, %v217
    %v219 = vpop.f32.mrf.mxu0
    %v220 = vpop.f32.mrf.mxu0
    %v221 = vadd.f32 0.0, %v220
    %v222 = vpop.f32.mrf.mxu0
    %223 = vdwg.mxu0
    %v224 = vpack.c.bf16 %v221, %v218
    %v225 = vld [vmem:[%s4] sm:$0x1]
    %v227 = vlaneseq
    %v228 = vshrl.u32 %v227, 7
    %v229 = vsub.s32 0, %v228
    %v230 = vrot.slane %v225, %v229
    %v234 = vunpack.c.l.b16 %v109
    %v235 = vunpack.c.l.b16 %v110
    %v236 = vpack.c.b16 %v235, %v234
    %vm237 = vcmask 130048
    %v239 = vsel %vm237, %v236, 0
    %241 = vmatprep.subr.bf16.mxu0 0
    %242 = vmatpush1.bf16.msra.mxu0 0
    %243 = vmatprep.subr.bf16.mxu0 0
    %244 = vmatpush1.bf16.msra.mxu0 0
    %245 = vmatprep.subr.bf16.mxu0 0
    %246 = vmatpush1.bf16.msra.mxu0 0
    %247 = vmatprep.subr.bf16.mxu0 0
    %248 = vmatpush1.bf16.msra.mxu0 0
    %249 = vmatprep.subr.bf16.mxu0 0
    %250 = vmatpush1.bf16.msra.mxu0 0
    %251 = vmatprep.subr.bf16.mxu0 0
    %252 = vmatpush1.bf16.msra.mxu0 0
    %253 = vmatprep.subr.bf16.mxu0 0
    %254 = vmatpush1.bf16.msra.mxu0 0
    %255 = vmatprep.subr.bf16.mxu0 0
    %256 = vmatpush1.bf16.msra.mxu0 %v224
    %257 = vmatprep.subr.bf16.mxu0 0
    %258 = vmatpush2.bf16.msra.mxu0 0
    %259 = vmatprep.subr.bf16.mxu0 0
    %260 = vmatpush2.bf16.msra.mxu0 0
    %261 = vmatprep.subr.bf16.mxu0 0
    %262 = vmatpush2.bf16.msra.mxu0 0
    %263 = vmatprep.subr.bf16.mxu0 0
    %264 = vmatpush2.bf16.msra.mxu0 0
    %265 = vmatprep.subr.bf16.mxu0 0
    %266 = vmatpush2.bf16.msra.mxu0 0
    %267 = vmatprep.subr.bf16.mxu0 0
    %268 = vmatpush2.bf16.msra.mxu0 0
    %269 = vmatprep.subr.bf16.mxu0 0
    %270 = vmatpush2.bf16.msra.mxu0 0
    %271 = vmatprep.subr.bf16.mxu0 0
    %272 = vmatpush2.bf16.msra.mxu0 0
    %273 = vmatprep.mubr.bf16.mxu0 0
    %274 = vmatmul.mubr.bf16.gmra.mxu0 %v239
    %v275 = vpop.f32.mrf.mxu0
    %v276 = vadd.f32 %v230, %v275
    %v277 = vpop.f32.mrf.mxu0
    %v278 = vpop.f32.mrf.mxu0
    %v279 = vadd.f32 %v230, %v278
    %v280 = vpop.f32.mrf.mxu0
    %281 = vdwg.mxu0
    %v282 = vmax.f32 %v276, 0.0
    %v283 = vmax.f32 %v279, 0.0
    %v284 = vld [vmem:[%s5] sm:$0x1]
    %v285 = vld [vmem:[%s6] sm:$0x1]
    %v286 = vlaneseq
    %v287 = vand.u32 %v286, 127
    %vm288 = vcmp.lt.s32.totalorder %v287, 16
    %v289 = vsel %vm288, 1, 0
    %v290 = vcvt.s32.f32 %v289
    %v291 = vmul.f32 %v282, %v290
    %v292 = vmul.f32 %v283, %v290
    %293 = vadd.xlane.f32.xlu0 %v291
    %v294 = vpop.xlane.xlu0 %293
    %295 = vadd.xlane.f32.xlu0 %v292
    %v296 = vpop.xlane.xlu0 %295
    %v297 = vmul.f32 %v294, 0.0625
    %v298 = vmul.f32 %v296, 0.0625
    %v299 = vsub.f32 %v282, %v297
    %v300 = vsub.f32 %v283, %v298
    %v301 = vmul.f32 %v299, %v290
    %v302 = vmul.f32 %v300, %v290
    %v303 = vmul.f32 %v301, %v301
    %v304 = vmul.f32 %v302, %v302
    %305 = vadd.xlane.f32.xlu0 %v303
    %v306 = vpop.xlane.xlu0 %305
    %307 = vadd.xlane.f32.xlu0 %v304
    %v308 = vpop.xlane.xlu0 %307
    %v309 = vmul.f32 %v306, 0.0625
    %v310 = vmul.f32 %v308, 0.0625
    %v311 = vadd.f32 %v309, 1e-05
    %v312 = vadd.f32 %v310, 1e-05
    %v313 = vrsqrt.pop %v311
    %v314 = vrsqrt.pop %v312
    %v315 = vmul.f32 %v299, %v313
    %v316 = vmul.f32 %v300, %v314
    %v318 = vlaneseq
    %v319 = vshrl.u32 %v318, 7
    %v320 = vsub.s32 0, %v319
    %v321 = vrot.slane %v284, %v320
    %v323 = vmul.f32 %v315, %v321
    %v324 = vmul.f32 %v316, %v321
    %v326 = vlaneseq
    %v327 = vshrl.u32 %v326, 7
    %v328 = vsub.s32 0, %v327
    %v329 = vrot.slane %v285, %v328
    %v331 = vadd.f32 %v323, %v329
    %v332 = vadd.f32 %v324, %v329
    %v333 = vpack.c.bf16 %v332, %v331
    %v334 = vld [vmem:[#allocation10] sm:$0xf]
    %v335 = vld [vmem:[#allocation10 + $0x4] sm:$0xf]
    %v336 = vld [vmem:[#allocation10 + $0x8] sm:$0xf]
    %v337 = vld [vmem:[#allocation10 + $0xc] sm:$0xf]
    %v338 = vld [vmem:[#allocation10 + $0x10] sm:$0xf]
    %v339 = vld [vmem:[#allocation10 + $0x14] sm:$0xf]
    %v340 = vld [vmem:[#allocation10 + $0x18] sm:$0xf]
    %v341 = vld [vmem:[#allocation10 + $0x1c] sm:$0xf]
    %v342 = vld [vmem:[#allocation10 + $0x20] sm:$0xf]
    %v343 = vld [vmem:[#allocation10 + $0x24] sm:$0xf]
    %v344 = vld [vmem:[#allocation10 + $0x28] sm:$0xf]
    %v345 = vld [vmem:[#allocation10 + $0x2c] sm:$0xf]
    %v346 = vld [vmem:[#allocation10 + $0x30] sm:$0xf]
    %v347 = vld [vmem:[#allocation10 + $0x34] sm:$0xf]
    %v348 = vld [vmem:[#allocation10 + $0x38] sm:$0xf]
    %v349 = vld [vmem:[#allocation10 + $0x3c] sm:$0xf]
    %v366 = vunpack.c.l.b16 %v334
    %v367 = vunpack.c.l.b16 %v335
    %v368 = vunpack.c.l.b16 %v336
    %v369 = vunpack.c.l.b16 %v337
    %v370 = vunpack.c.l.b16 %v338
    %v371 = vunpack.c.l.b16 %v339
    %v372 = vunpack.c.l.b16 %v340
    %v373 = vunpack.c.l.b16 %v341
    %v374 = vunpack.c.l.b16 %v342
    %v375 = vunpack.c.l.b16 %v343
    %v376 = vunpack.c.l.b16 %v344
    %v377 = vunpack.c.l.b16 %v345
    %v378 = vunpack.c.l.b16 %v346
    %v379 = vunpack.c.l.b16 %v347
    %v380 = vunpack.c.l.b16 %v348
    %v381 = vunpack.c.l.b16 %v349
    %v382 = vpack.c.b16 %v367, %v366
    %v383 = vpack.c.b16 %v369, %v368
    %v384 = vpack.c.b16 %v371, %v370
    %v385 = vpack.c.b16 %v373, %v372
    %v386 = vpack.c.b16 %v375, %v374
    %v387 = vpack.c.b16 %v377, %v376
    %v388 = vpack.c.b16 %v379, %v378
    %v389 = vpack.c.b16 %v381, %v380
    %398 = vmatprep.subr.bf16.mxu0 0
    %399 = vmatpush1.bf16.msra.mxu0 %v389
    %400 = vmatprep.subr.bf16.mxu0 0
    %401 = vmatpush1.bf16.msra.mxu0 %v388
    %402 = vmatprep.subr.bf16.mxu0 0
    %403 = vmatpush1.bf16.msra.mxu0 %v387
    %404 = vmatprep.subr.bf16.mxu0 0
    %405 = vmatpush1.bf16.msra.mxu0 %v386
    %406 = vmatprep.subr.bf16.mxu0 0
    %407 = vmatpush1.bf16.msra.mxu0 %v385
    %408 = vmatprep.subr.bf16.mxu0 0
    %409 = vmatpush1.bf16.msra.mxu0 %v384
    %410 = vmatprep.subr.bf16.mxu0 0
    %411 = vmatpush1.bf16.msra.mxu0 %v383
    %412 = vmatprep.subr.bf16.mxu0 0
    %413 = vmatpush1.bf16.msra.mxu0 %v382
    %414 = vmatprep.subr.bf16.mxu0 0
    %415 = vmatpush2.bf16.msra.mxu0 0
    %416 = vmatprep.subr.bf16.mxu0 0
    %417 = vmatpush2.bf16.msra.mxu0 0
    %418 = vmatprep.subr.bf16.mxu0 0
    %419 = vmatpush2.bf16.msra.mxu0 0
    %420 = vmatprep.subr.bf16.mxu0 0
    %421 = vmatpush2.bf16.msra.mxu0 0
    %422 = vmatprep.subr.bf16.mxu0 0
    %423 = vmatpush2.bf16.msra.mxu0 0
    %424 = vmatprep.subr.bf16.mxu0 0
    %425 = vmatpush2.bf16.msra.mxu0 0
    %426 = vmatprep.subr.bf16.mxu0 0
    %427 = vmatpush2.bf16.msra.mxu0 0
    %428 = vmatprep.subr.bf16.mxu0 0
    %429 = vmatpush2.bf16.msra.mxu0 0
    %430 = vmatprep.mubr.bf16.mxu0 0
    %431 = vmatmul.mubr.bf16.gmra.mxu0 %v333
    %v432 = vpop.f32.mrf.mxu0
    %v433 = vadd.f32 0.0, %v432
    %v434 = vpop.f32.mrf.mxu0
    %v435 = vpop.f32.mrf.mxu0
    %v436 = vadd.f32 0.0, %v435
    %v437 = vpop.f32.mrf.mxu0
    %438 = vdwg.mxu0
    %v439 = vpack.c.bf16 %v436, %v433
    %v440 = vld [vmem:[%s8] sm:$0x1]
    %v442 = vlaneseq
    %v443 = vshrl.u32 %v442, 7
    %v444 = vsub.s32 0, %v443
    %v445 = vrot.slane %v440, %v444
    %447 = vmatprep.subr.bf16.mxu0 0
    %448 = vmatpush1.bf16.msra.mxu0 0
    %449 = vmatprep.subr.bf16.mxu0 0
    %450 = vmatpush1.bf16.msra.mxu0 0
    %451 = vmatprep.subr.bf16.mxu0 0
    %452 = vmatpush1.bf16.msra.mxu0 0
    %453 = vmatprep.subr.bf16.mxu0 0
    %454 = vmatpush1.bf16.msra.mxu0 0
    %455 = vmatprep.subr.bf16.mxu0 0
    %456 = vmatpush1.bf16.msra.mxu0 0
    %457 = vmatprep.subr.bf16.mxu0 0
    %458 = vmatpush1.bf16.msra.mxu0 0
    %459 = vmatprep.subr.bf16.mxu0 0
    %460 = vmatpush1.bf16.msra.mxu0 0
    %461 = vmatprep.subr.bf16.mxu0 0
    %462 = vmatpush1.bf16.msra.mxu0 %v439
    %463 = vmatprep.subr.bf16.mxu0 0
    %464 = vmatpush2.bf16.msra.mxu0 0
    %465 = vmatprep.subr.bf16.mxu0 0
    %466 = vmatpush2.bf16.msra.mxu0 0
    %467 = vmatprep.subr.bf16.mxu0 0
    %468 = vmatpush2.bf16.msra.mxu0 0
    %469 = vmatprep.subr.bf16.mxu0 0
    %470 = vmatpush2.bf16.msra.mxu0 0
    %471 = vmatprep.subr.bf16.mxu0 0
    %472 = vmatpush2.bf16.msra.mxu0 0
    %473 = vmatprep.subr.bf16.mxu0 0
    %474 = vmatpush2.bf16.msra.mxu0 0
    %475 = vmatprep.subr.bf16.mxu0 0
    %476 = vmatpush2.bf16.msra.mxu0 0
    %477 = vmatprep.subr.bf16.mxu0 0
    %478 = vmatpush2.bf16.msra.mxu0 0
    %479 = vmatprep.mubr.bf16.mxu0 0
    %480 = vmatmul.mubr.bf16.gmra.mxu0 %v239
    %v481 = vpop.f32.mrf.mxu0
    %v482 = vadd.f32 %v445, %v481
    %v483 = vpop.f32.mrf.mxu0
    %v484 = vpop.f32.mrf.mxu0
    %v485 = vadd.f32 %v445, %v484
    %v486 = vpop.f32.mrf.mxu0
    %487 = vdwg.mxu0
    %488 = vst [vmem:[#allocation11] sm:$0xff] %v482
    %489 = vst [vmem:[#allocation11 + $0x8] sm:$0xff] %v485
    %v490 = vld [vmem:[#allocation7] sm:$0xf]
    %v491 = vpack.c.bf16 %v485, %v482
    %v493 = vsel %vm237, %v490, 0
    %495 = vmatprep.subr.bf16.mxu0 0
    %496 = vmatpush1.bf16.msra.mxu0 0
    %497 = vmatprep.subr.bf16.mxu0 0
    %498 = vmatpush1.bf16.msra.mxu0 0
    %499 = vmatprep.subr.bf16.mxu0 0
    %500 = vmatpush1.bf16.msra.mxu0 0
    %501 = vmatprep.subr.bf16.mxu0 0
    %502 = vmatpush1.bf16.msra.mxu0 0
    %503 = vmatprep.subr.bf16.mxu0 0
    %504 = vmatpush1.bf16.msra.mxu0 0
    %505 = vmatprep.subr.bf16.mxu0 0
    %506 = vmatpush1.bf16.msra.mxu0 0
    %507 = vmatprep.subr.bf16.mxu0 0
    %508 = vmatpush1.bf16.msra.mxu0 0
    %509 = vmatprep.subr.bf16.mxu0 0
    %510 = vmatpush1.bf16.msra.mxu0 %v491
    %511 = vmatprep.subr.bf16.mxu0 0
    %512 = vmatpush2.bf16.msra.mxu0 0
    %513 = vmatprep.subr.bf16.mxu0 0
    %514 = vmatpush2.bf16.msra.mxu0 0
    %515 = vmatprep.subr.bf16.mxu0 0
    %516 = vmatpush2.bf16.msra.mxu0 0
    %517 = vmatprep.subr.bf16.mxu0 0
    %518 = vmatpush2.bf16.msra.mxu0 0
    %519 = vmatprep.subr.bf16.mxu0 0
    %520 = vmatpush2.bf16.msra.mxu0 0
    %521 = vmatprep.subr.bf16.mxu0 0
    %522 = vmatpush2.bf16.msra.mxu0 0
    %523 = vmatprep.subr.bf16.mxu0 0
    %524 = vmatpush2.bf16.msra.mxu0 0
    %525 = vmatprep.subr.bf16.mxu0 0
    %526 = vmatpush2.bf16.msra.mxu0 0
    %527 = vmatprep.mubr.bf16.mxu0 0
    %528 = vmatmul.mubr.bf16.gmra.mxu0 %v493
    %v529 = vpop.f32.mrf.mxu0
    %v530 = vadd.f32 0.0, %v529
    %v531 = vpop.f32.mrf.mxu0
    %v532 = vpop.f32.mrf.mxu0
    %v533 = vpop.f32.mrf.mxu0
    %534 = vdwg.mxu0
    %535 = vst [vmem:[#allocation12] sm:$0xff] %v530
    // Predicated region
    $region66: #{tpu_custom_call.1} parent=1 // pred_check
      _
    $region67: #{tpu_custom_call.1} parent=1 // pred_check_branch
      %537 = sbr.rel (0) target = $region69
    $region68: #{tpu_custom_call.1} parent=1 // pred_region
      %s539 = ssub.s32 256, 256
      %540 = vsyncadd [#allocation4], %s539
      %s541 = sshll.u32 [#allocation11], 4
      %s542 = int_to_ptr.vmem [resolvable:$true] %s541
      %547 = dma.vmem_to_hbm [thread:$0]  %s542, 256, %s11, [#allocation4], 128, 128, 8
    $region69: #{tpu_custom_call.1} parent=1 // pred_fallthru
      _
    // Predicated region
    $region70: #{tpu_custom_call.1} parent=1 // pred_check
      _
    $region71: #{tpu_custom_call.1} parent=1 // pred_check_branch
      %549 = sbr.rel (0) target = $region73
    $region72: #{tpu_custom_call.1} parent=1 // pred_region
      %s551 = ssub.s32 128, 128
      %552 = vsyncadd [#allocation13], %s551
      %s554 = sshll.u32 [#allocation12], 4
      %s555 = int_to_ptr.vmem [resolvable:$true] %s554
      %557 = dma.vmem_to_hbm [thread:$0]  %s555, 128, %s12, [#allocation13]
    $region73: #{tpu_custom_call.1} parent=1 // pred_fallthru
      _
    // Predicated region
    $region74: #{tpu_custom_call.1} parent=1 // pred_check
      _
    $region75: #{tpu_custom_call.1} parent=1 // pred_check_branch
      %559 = sbr.rel (0) target = $region77
    $region76: #{tpu_custom_call.1} parent=1 // pred_region
      %560 = dma.done [#allocation4], 256
    $region77: #{tpu_custom_call.1} parent=1 // pred_fallthru
      _
    // Predicated region
    $region78: #{tpu_custom_call.1} parent=1 // pred_check
      _
    $region79: #{tpu_custom_call.1} parent=1 // pred_check_branch
      %562 = sbr.rel (0) target = $region81
    $region80: #{tpu_custom_call.1} parent=1 // pred_region
      %563 = dma.done [#allocation13], 128
    $region81: #{tpu_custom_call.1} parent=1 // pred_fallthru
      _
    %564 = vsyncpa [#allocation3], 1
    %565 = vsyncpa [#allocation6], 1
    %566 = vsyncpa [#allocation9], 1
    %567 = vsyncpa [#allocation4], 1
    %568 = vsyncpa [#allocation13], 1

</llo_original>
